<compile_context>
chip_gen: v7x
topology: tpu7x:2x2x1
jax: 0.10.0
libtpu: 0.0.40
codegen_flags: <defaults>
</compile_context>

<pallas_src>
import functools

import jax
import jax.numpy as jnp
from jax import lax
from jax.experimental import pallas as pl
from jax.experimental.pallas import tpu as pltpu

_LN_EPS = 1e-5  # nn.LayerNorm default


def _round_up(a: int, b: int) -> int:
    return -(-a // b) * b


def adaptformer_kernel(x_ref, gamma_ref, beta_ref,
                       wd_ref, bd_ref, wu_ref, bu_ref, o_ref, *, inv_k):
    # ---- LayerNorm over the feature (lane) axis, f32 math, one-pass stats ----
    x = x_ref[...].astype(jnp.float32)                        # (tm, Kp)
    s = jnp.sum(x, axis=-1, keepdims=True)
    s2 = jnp.sum(x * x, axis=-1, keepdims=True)
    mean = s * inv_k                                          # true-K divisor
    var = jnp.maximum(s2 * inv_k - mean * mean, 0.0)
    inv = lax.rsqrt(var + _LN_EPS)                            # EUP rsqrt
    xn = (x - mean) * inv * gamma_ref[...].astype(jnp.float32) \
         + beta_ref[...].astype(jnp.float32)                  # (tm, Kp)

    # ---- down_proj: xn @ W_down.T -> (tm, Bdp); contraction on last dims ----
    wd = wd_ref[...]
    h = lax.dot_general(
        xn.astype(wd.dtype), wd,
        dimension_numbers=(((1,), (1,)), ((), ())),
        preferred_element_type=jnp.float32)
    h = jnp.maximum(h + bd_ref[...].astype(jnp.float32), 0.0)  # bias + ReLU

    # ---- up_proj (scale pre-folded into W_up/b_up): h @ W_up.T -> (tm, Kp) ----
    wu = wu_ref[...]
    y = lax.dot_general(
        h.astype(wu.dtype), wu,
        dimension_numbers=(((1,), (1,)), ((), ())),
        preferred_element_type=jnp.float32)
    y = y + bu_ref[...].astype(jnp.float32)

    o_ref[...] = y.astype(o_ref.dtype)


def adaptformer_forward(x, gamma, beta, w_down, b_down, w_up, b_up, scale,
                        *, tm=512):
    """Fused AdaptFormer forward.

    x:       (..., in_dim)
    gamma:   (in_dim,)        LayerNorm weight
    beta:    (in_dim,)        LayerNorm bias
    w_down:  (bottle_dim, in_dim)
    b_down:  (bottle_dim,)
    w_up:    (in_dim, bottle_dim)
    b_up:    (in_dim,)
    scale:   scalar (shape () or (1,))
    returns: (..., in_dim)
    """
    *lead, K = x.shape
    Bd = w_down.shape[0]
    assert w_down.shape == (Bd, K)
    assert w_up.shape == (K, Bd)

    M = 1
    for d in lead:
        M *= d

    # ---- pad feature / bottleneck dims to lane-dense multiples of 128 ----
    Kp = _round_up(K, 128)
    Bdp = _round_up(Bd, 128)

    # Fold the learned scalar into the up-projection (mathematically exact).
    scale_f = jnp.reshape(jnp.asarray(scale, dtype=jnp.float32), ())
    wu_s = (w_up.astype(jnp.float32) * scale_f).astype(w_up.dtype)
    bu_s = (b_up.astype(jnp.float32) * scale_f).astype(b_up.dtype)

    gamma_p = jnp.pad(gamma, (0, Kp - K))
    beta_p = jnp.pad(beta, (0, Kp - K))
    wd_p = jnp.pad(w_down, ((0, Bdp - Bd), (0, Kp - K)))
    bd_p = jnp.pad(b_down, (0, Bdp - Bd))
    wu_p = jnp.pad(wu_s, ((0, Kp - K), (0, Bdp - Bd)))
    bu_p = jnp.pad(bu_s, (0, Kp - K))

    x2 = x.reshape(M, K)

    # ---- row-tile selection ----
    # Keep at least 2 grid steps so the parallel axis can shard across the
    # two TensorCores on v7x (no-op on single-TC v5e/v6e).
    tm = min(tm, max(8, _round_up(-(-M // 2), 8)))
    # Cap tm so the per-step VMEM working set (in/out double buffers + f32
    # temporaries + resident weights) stays well under v7x's 64 MiB VMEM and
    # under the 64 MiB scoped limit we request below.
    itemsize = jnp.dtype(x.dtype).itemsize
    w_itemsize = jnp.dtype(w_down.dtype).itemsize
    weights_bytes = 2 * 2 * Kp * Bdp * w_itemsize          # double-buffered, resident
    per_row_bytes = Kp * (2 * itemsize + 2 * itemsize + 4 * 4)
    budget = 28 * 1024 * 1024 - weights_bytes
    tm_cap = max(8, (budget // per_row_bytes) // 8 * 8)
    tm = max(8, min(tm, tm_cap))

    Mp = _round_up(M, tm)
    pad_rows = Mp - M
    if pad_rows or Kp != K:
        x2 = jnp.pad(x2, ((0, pad_rows), (0, Kp - K)))

    grid = (Mp // tm,)

    row_spec = pl.BlockSpec((tm, Kp), lambda i: (i, 0))
    # Constant block index -> weights stay resident in VMEM across the grid.
    const2d = lambda r, c: pl.BlockSpec((r, c), lambda i: (0, 0))

    cost = pl.CostEstimate(
        flops=4 * Mp * Kp * Bdp,                      # two matmuls
        transcendentals=Mp,                           # rsqrt per row
        bytes_accessed=(2 * Mp * Kp * itemsize        # x in + y out
                        + 2 * Kp * Bdp * w_itemsize   # W_down, W_up
                        + (3 * Kp + Bdp) * w_itemsize),
    )

    kernel = functools.partial(adaptformer_kernel, inv_k=float(1.0 / K))

    out = pl.pallas_call(
        kernel,
        out_shape=jax.ShapeDtypeStruct((Mp, Kp), x.dtype),
        grid=grid,
        in_specs=[
            row_spec,                 # x tile
            const2d(1, Kp),           # gamma
            const2d(1, Kp),           # beta
            const2d(Bdp, Kp),         # W_down (out, in) layout, no transpose
            const2d(1, Bdp),          # b_down
            const2d(Kp, Bdp),         # W_up (out, in) layout, scale folded in
            const2d(1, Kp),           # b_up (scale folded in)
        ],
        out_specs=row_spec,
        compiler_params=pltpu.CompilerParams(
            dimension_semantics=("parallel",),
            vmem_limit_bytes=64 << 20),
        cost_estimate=cost,
    )(x2,
      gamma_p.reshape(1, Kp), beta_p.reshape(1, Kp),
      wd_p, bd_p.reshape(1, Bdp),
      wu_p, bu_p.reshape(1, Kp))

    return out[:M, :K].reshape(*lead, K)


def adaptformer_reference(x, gamma, beta, w_down, b_down, w_up, b_up, scale):
    """Pure-JAX reference mirroring the PyTorch module."""
    mean = jnp.mean(x, axis=-1, keepdims=True)
    var = jnp.mean((x - mean) ** 2, axis=-1, keepdims=True)
    xn = (x - mean) / jnp.sqrt(var + _LN_EPS) * gamma + beta
    h = jnp.einsum("...k,bk->...b", xn, w_down) + b_down
    h = jnp.maximum(h, 0.0)
    y = jnp.einsum("...b,kb->...k", h, w_up) + b_up
    return y * jnp.reshape(scale, ())


if __name__ == "__main__":
    # Small deterministic setup: batch=2, seq=8, in_dim=32, bottle_dim=8.
    B, S, IN, BOTTLE = 2, 8, 32, 8

    key = jax.random.PRNGKey(0)
    k_x, k_g, k_b, k_wd, k_bd, k_wu, k_bu, k_s = jax.random.split(key, 8)

    x = jax.random.normal(k_x, (B, S, IN), dtype=jnp.float32)

    # NOTE: the real module initializes up_proj weight / biases to zero and
    # scale to 1; random nonzero values are used here so the numeric check is
    # meaningful.  Forward semantics are identical.
    gamma = 1.0 + 0.1 * jax.random.normal(k_g, (IN,), dtype=jnp.float32)
    beta = 0.1 * jax.random.normal(k_b, (IN,), dtype=jnp.float32)
    w_down = jax.random.normal(k_wd, (BOTTLE, IN), dtype=jnp.float32) * 0.2
    b_down = jax.random.normal(k_bd, (BOTTLE,), dtype=jnp.float32) * 0.1
    w_up = jax.random.normal(k_wu, (IN, BOTTLE), dtype=jnp.float32) * 0.2
    b_up = jax.random.normal(k_bu, (IN,), dtype=jnp.float32) * 0.1
    scale = 0.5 + jax.random.uniform(k_s, (1,), dtype=jnp.float32)

    out = adaptformer_forward(x, gamma, beta, w_down, b_down, w_up, b_up, scale)
    out = jax.block_until_ready(out)

    ref = adaptformer_reference(x, gamma, beta, w_down, b_down, w_up, b_up, scale)

    assert out.shape == (B, S, IN), out.shape
    err = float(jnp.abs(out - ref).max())
    assert jnp.allclose(out, ref, atol=1e-4, rtol=1e-4), err
    print("KERNEL_OK")
</pallas_src>

<mosaic_0001>
module attributes {stable_mosaic.version = 11 : i64} {
  func.func @adaptformer_kernel(%arg0: i32, %arg1: memref<8x128xf32, #tpu.memory_space<vmem>>, %arg2: memref<1x128xf32, #tpu.memory_space<vmem>>, %arg3: memref<1x128xf32, #tpu.memory_space<vmem>>, %arg4: memref<128x128xf32, #tpu.memory_space<vmem>>, %arg5: memref<1x128xf32, #tpu.memory_space<vmem>>, %arg6: memref<128x128xf32, #tpu.memory_space<vmem>>, %arg7: memref<1x128xf32, #tpu.memory_space<vmem>>, %arg8: memref<8x128xf32, #tpu.memory_space<vmem>>) attributes {dimension_semantics = [#tpu.dimension_semantics<parallel>], iteration_bounds = array<i64: 2>, scalar_prefetch = 0 : i64, scratch_operands = 0 : i64, tpu.core_type = #tpu.core_type<tc>, window_params = [{transform_indices = @transform_0, window_bounds = array<i64: 8, 128>}, {pipeline_mode = #tpu.pipeline_mode<synchronous>, transform_indices = @transform_1, window_bounds = array<i64: 1, 128>}, {pipeline_mode = #tpu.pipeline_mode<synchronous>, transform_indices = @transform_2, window_bounds = array<i64: 1, 128>}, {pipeline_mode = #tpu.pipeline_mode<synchronous>, transform_indices = @transform_3, window_bounds = array<i64: 128, 128>}, {pipeline_mode = #tpu.pipeline_mode<synchronous>, transform_indices = @transform_4, window_bounds = array<i64: 1, 128>}, {pipeline_mode = #tpu.pipeline_mode<synchronous>, transform_indices = @transform_5, window_bounds = array<i64: 128, 128>}, {pipeline_mode = #tpu.pipeline_mode<synchronous>, transform_indices = @transform_6, window_bounds = array<i64: 1, 128>}, {transform_indices = @transform_7, window_bounds = array<i64: 8, 128>}]} {
    %c0 = arith.constant 0 : index
    %c0_0 = arith.constant 0 : index
    %0 = vector.load %arg1[%c0, %c0_0] : memref<8x128xf32, #tpu.memory_space<vmem>>, vector<8x128xf32>
    %cst = arith.constant dense<0.000000e+00> : vector<8xf32>
    %1 = vector.multi_reduction <add>, %0, %cst [1] : vector<8x128xf32> to vector<8xf32>
    %2 = vector.shape_cast %1 : vector<8xf32> to vector<8x1xf32>
    %3 = arith.mulf %0, %0 : vector<8x128xf32>
    %cst_1 = arith.constant dense<0.000000e+00> : vector<8xf32>
    %4 = vector.multi_reduction <add>, %3, %cst_1 [1] : vector<8x128xf32> to vector<8xf32>
    %5 = vector.shape_cast %4 : vector<8xf32> to vector<8x1xf32>
    %cst_2 = arith.constant 3.125000e-02 : f32
    %6 = vector.broadcast %cst_2 : f32 to vector<8x1xf32>
    %7 = arith.mulf %2, %6 : vector<8x1xf32>
    %cst_3 = arith.constant 3.125000e-02 : f32
    %8 = vector.broadcast %cst_3 : f32 to vector<8x1xf32>
    %9 = arith.mulf %5, %8 : vector<8x1xf32>
    %10 = arith.mulf %7, %7 : vector<8x1xf32>
    %11 = arith.subf %9, %10 : vector<8x1xf32>
    %cst_4 = arith.constant 0.000000e+00 : f32
    %12 = vector.broadcast %cst_4 : f32 to vector<8x1xf32>
    %13 = arith.maximumf %11, %12 : vector<8x1xf32>
    %cst_5 = arith.constant 9.99999974E-6 : f32
    %14 = vector.broadcast %cst_5 : f32 to vector<8x1xf32>
    %15 = arith.addf %13, %14 : vector<8x1xf32>
    %16 = math.rsqrt %15 : vector<8x1xf32>
    %17 = vector.broadcast %7 : vector<8x1xf32> to vector<8x128xf32>
    %18 = arith.subf %0, %17 : vector<8x128xf32>
    %19 = vector.broadcast %16 : vector<8x1xf32> to vector<8x128xf32>
    %20 = arith.mulf %18, %19 : vector<8x128xf32>
    %c0_6 = arith.constant 0 : index
    %c0_7 = arith.constant 0 : index
    %21 = vector.load %arg2[%c0_6, %c0_7] : memref<1x128xf32, #tpu.memory_space<vmem>>, vector<1x128xf32>
    %22 = vector.broadcast %21 : vector<1x128xf32> to vector<8x128xf32>
    %23 = arith.mulf %20, %22 : vector<8x128xf32>
    %c0_8 = arith.constant 0 : index
    %c0_9 = arith.constant 0 : index
    %24 = vector.load %arg3[%c0_8, %c0_9] : memref<1x128xf32, #tpu.memory_space<vmem>>, vector<1x128xf32>
    %25 = vector.broadcast %24 : vector<1x128xf32> to vector<8x128xf32>
    %26 = arith.addf %23, %25 : vector<8x128xf32>
    %c0_10 = arith.constant 0 : index
    %c0_11 = arith.constant 0 : index
    %27 = vector.load %arg4[%c0_10, %c0_11] : memref<128x128xf32, #tpu.memory_space<vmem>>, vector<128x128xf32>
    %cst_12 = arith.constant dense<0.000000e+00> : vector<8x128xf32>
    %28 = tpu.matmul %26, %27, %cst_12 {dimension_numbers = #tpu.dot_dimension_numbers<[1], [1], [0], [0], [0, 0, 1, 0], [], []>} : vector<8x128xf32>, vector<128x128xf32>, vector<8x128xf32> -> vector<8x128xf32>
    %c0_13 = arith.constant 0 : index
    %c0_14 = arith.constant 0 : index
    %29 = vector.load %arg5[%c0_13, %c0_14] : memref<1x128xf32, #tpu.memory_space<vmem>>, vector<1x128xf32>
    %30 = vector.broadcast %29 : vector<1x128xf32> to vector<8x128xf32>
    %31 = arith.addf %28, %30 : vector<8x128xf32>
    %cst_15 = arith.constant 0.000000e+00 : f32
    %32 = vector.broadcast %cst_15 : f32 to vector<8x128xf32>
    %33 = arith.maximumf %31, %32 : vector<8x128xf32>
    %c0_16 = arith.constant 0 : index
    %c0_17 = arith.constant 0 : index
    %34 = vector.load %arg6[%c0_16, %c0_17] : memref<128x128xf32, #tpu.memory_space<vmem>>, vector<128x128xf32>
    %cst_18 = arith.constant dense<0.000000e+00> : vector<8x128xf32>
    %35 = tpu.matmul %33, %34, %cst_18 {dimension_numbers = #tpu.dot_dimension_numbers<[1], [1], [0], [0], [0, 0, 1, 0], [], []>} : vector<8x128xf32>, vector<128x128xf32>, vector<8x128xf32> -> vector<8x128xf32>
    %c0_19 = arith.constant 0 : index
    %c0_20 = arith.constant 0 : index
    %36 = vector.load %arg7[%c0_19, %c0_20] : memref<1x128xf32, #tpu.memory_space<vmem>>, vector<1x128xf32>
    %37 = vector.broadcast %36 : vector<1x128xf32> to vector<8x128xf32>
    %38 = arith.addf %35, %37 : vector<8x128xf32>
    %c0_21 = arith.constant 0 : index
    %c0_22 = arith.constant 0 : index
    %39 = vector.load %arg8[%c0_21, %c0_22] : memref<8x128xf32, #tpu.memory_space<vmem>>, vector<8x128xf32>
    tpu.vector_store %arg8[%c0_21, %c0_22], %38 {strides = array<i32>} : memref<8x128xf32, #tpu.memory_space<vmem>>, vector<8x128xf32>,
    return
  }
  func.func @transform_0(%arg0: i32) -> (i32, i32) {
    %c0_i32 = arith.constant 0 : i32
    %c0_i32_0 = arith.constant 0 : i32
    return %arg0, %c0_i32 : i32, i32
  }
  func.func @transform_1(%arg0: i32) -> (i32, i32) {
    %c0_i32 = arith.constant 0 : i32
    %c0_i32_0 = arith.constant 0 : i32
    %c0_i32_1 = arith.constant 0 : i32
    return %c0_i32, %c0_i32_0 : i32, i32
  }
  func.func @transform_2(%arg0: i32) -> (i32, i32) {
    %c0_i32 = arith.constant 0 : i32
    %c0_i32_0 = arith.constant 0 : i32
    %c0_i32_1 = arith.constant 0 : i32
    return %c0_i32, %c0_i32_0 : i32, i32
  }
  func.func @transform_3(%arg0: i32) -> (i32, i32) {
    %c0_i32 = arith.constant 0 : i32
    %c0_i32_0 = arith.constant 0 : i32
    %c0_i32_1 = arith.constant 0 : i32
    return %c0_i32, %c0_i32_0 : i32, i32
  }
  func.func @transform_4(%arg0: i32) -> (i32, i32) {
    %c0_i32 = arith.constant 0 : i32
    %c0_i32_0 = arith.constant 0 : i32
    %c0_i32_1 = arith.constant 0 : i32
    return %c0_i32, %c0_i32_0 : i32, i32
  }
  func.func @transform_5(%arg0: i32) -> (i32, i32) {
    %c0_i32 = arith.constant 0 : i32
    %c0_i32_0 = arith.constant 0 : i32
    %c0_i32_1 = arith.constant 0 : i32
    return %c0_i32, %c0_i32_0 : i32, i32
  }
  func.func @transform_6(%arg0: i32) -> (i32, i32) {
    %c0_i32 = arith.constant 0 : i32
    %c0_i32_0 = arith.constant 0 : i32
    %c0_i32_1 = arith.constant 0 : i32
    return %c0_i32, %c0_i32_0 : i32, i32
  }
  func.func @transform_7(%arg0: i32) -> (i32, i32) {
    %c0_i32 = arith.constant 0 : i32
    %c0_i32_0 = arith.constant 0 : i32
    return %arg0, %c0_i32 : i32, i32
  }
}

</mosaic_0001>

<llo_original>
// kernel: tpu_custom_call.1
$region0: #{tpu_custom_call.1}
  #allocation0 [shape = 'u32[]', space=smem, size = 0x4, offset = 0x4, fixed_abs, tag = 'smem constant byte address 0x4 - core index']
  #allocation1 [shape = 'u32[144,128]{1,0:T(1,128)}', space=vmem, size = 0x12000, scoped, tag = 'internal scratch']
  %s0 = inlined_call_operand.hbm [shape: f32[16,128], index: 0, kind: input, shape index: {}]
  %s1 = inlined_call_operand.hbm [shape: f32[1,128], index: 1, kind: input, shape index: {}]
  %s2 = inlined_call_operand.hbm [shape: f32[1,128], index: 2, kind: input, shape index: {}]
  %s3 = inlined_call_operand.hbm [shape: f32[128,128], index: 3, kind: input, shape index: {}]
  %s4 = inlined_call_operand.hbm [shape: f32[1,128], index: 4, kind: input, shape index: {}]
  %s5 = inlined_call_operand.hbm [shape: f32[128,128], index: 5, kind: input, shape index: {}]
  %s6 = inlined_call_operand.hbm [shape: f32[1,128], index: 6, kind: input, shape index: {}]
  %s7 = inlined_call_operand.hbm [shape: f32[16,128], index: 7, kind: output, shape index: {}]
  %s8 = sld [smem:[#allocation0]]
  $region89: #{tpu_custom_call.1} parent=0
    _
  %s10 = ssub.s32 1, %s8
  %s11 = scalar_select 0, %s10, %s8
  $region1: #{tpu_custom_call.1} parent=0
    #allocation2 [shape = 'u8[8192]{0}', space=vmem, size = 0x2000, scoped, tag = 'input window, operand 0']
    #allocation3 [shape = 's32[2]{0}', space=sflag, size = 0x8, scoped, tag = 'scoped memory for tpu_custom_call.1']
    #allocation4 [shape = 's32[2]{0}', space=sflag, size = 0x8, scoped, tag = 'scoped memory for tpu_custom_call.1']
    #allocation5 [shape = 'u8[512]{0}', space=vmem, size = 0x400, scoped, tag = 'input window, operand 1, single buffered']
    #allocation6 [shape = 's32[1]{0}', space=sflag, size = 0x4, scoped, tag = 'scoped memory for tpu_custom_call.1']
    #allocation7 [shape = 'u8[512]{0}', space=vmem, size = 0x400, scoped, tag = 'input window, operand 2, single buffered']
    #allocation8 [shape = 'u8[65536]{0}', space=vmem, size = 0x10000, scoped, tag = 'input window, operand 3, single buffered']
    #allocation9 [shape = 's32[1]{0}', space=sflag, size = 0x4, scoped, tag = 'scoped memory for tpu_custom_call.1']
    #allocation10 [shape = 'u8[512]{0}', space=vmem, size = 0x400, scoped, tag = 'input window, operand 4, single buffered']
    #allocation11 [shape = 'u8[65536]{0}', space=vmem, size = 0x10000, scoped, tag = 'input window, operand 5, single buffered']
    #allocation12 [shape = 's32[1]{0}', space=sflag, size = 0x4, scoped, tag = 'scoped memory for tpu_custom_call.1']
    #allocation13 [shape = 'u8[512]{0}', space=vmem, size = 0x400, scoped, tag = 'input window, operand 6, single buffered']
    #allocation14 [shape = 'u8[8192]{0}', space=vmem, size = 0x2000, scoped, tag = 'output window, operand 0']
    %12 = vsyncpa [#allocation3], 0
    %s13 = scalar_lea.sflag [#allocation3], 1
    %14 = vsyncpa %s13, 0
    %15 = vsyncpa [#allocation6], 0
    %16 = vsyncpa [#allocation9], 0
    %17 = vsyncpa [#allocation12], 0
    %18 = vsyncpa [#allocation4], 0
    %s19 = scalar_lea.sflag [#allocation4], 1
    %20 = vsyncpa %s19, 0
    loop: start=0, step=1, limit=4
    $region2: #{tpu_custom_call.1} parent=1 // loop_pre_header
      _
    $region3: #{tpu_custom_call.1} parent=1 // loop_header
      %s22 = sphi 0, %s26
      %p23 = scmp.ge.s32.totalorder %s22, 4
      %s32 = sphi 0, %s34
      %s35 = sphi 0, %s32
      %s36 = sphi 0, %s35
      %s52 = sphi 0, %s36
      %s56 = sphi 0, %s56
      %s58 = sphi 0, %s56
      %s59 = sphi 0, %s58
      %s73 = sphi 0, %s59
      %s77 = sphi 0, %s77
      %s79 = sphi 0, %s77
      %s80 = sphi 0, %s79
      %s94 = sphi 0, %s80
      %s98 = sphi 0, %s98
      %s100 = sphi 0, %s98
      %s101 = sphi 0, %s100
      %s115 = sphi 0, %s101
      %s119 = sphi 0, %s119
      %s121 = sphi 0, %s119
      %s122 = sphi 0, %s121
      %s136 = sphi 0, %s122
      %s140 = sphi 0, %s140
      %s142 = sphi 0, %s140
      %s143 = sphi 0, %s142
      %s157 = sphi 0, %s143
      %s161 = sphi 0, %s161
      %s163 = sphi 0, %s161
      %s164 = sphi 0, %s163
      %s178 = sphi 0, %s164
      %s184 = sphi 0, %s186
      %s187 = sphi 0, %s184
      %s188 = sphi 0, %s187
      %s204 = sphi 0, %s188
    $region4: #{tpu_custom_call.1} parent=1 // loop_header_branch
      %25 = sbr.rel (%p23) target = $region8
    $region5: #{tpu_custom_call.1} parent=1 // loop_body
      %s27 = ssub.s32 %s22, 1
      %s28 = ssub.s32 %s22, 2
      %s29 = sadd.s32 %s22, 1
      %s30 = ssub.s32 %s22, %s29
      %p31 = scmp.eq.s32.totalorder %s30, 0
      %s33 = sadd.s32 %s32, 1
      %s34 = scalar_select %p31, %s32, %s33
      %p37 = pneg %p31
      %p38 = scmp.eq.s32.totalorder %s22, 1
      %p39 = por %p37, %p38
      %p40 = scmp.ne.s32.totalorder %s32, %s35
      %p41 = scmp.eq.s32.totalorder %s22, 0
      %p42 = por %p40, %p41
      %p43 = scmp.ne.s32.totalorder %s32, %s35
      %p44 = scmp.eq.s32.totalorder %s27, 1
      %p45 = por %p43, %p44
      %p46 = scmp.ne.s32.totalorder %s35, %s36
      %p47 = scmp.eq.s32.totalorder %s27, 0
      %p48 = por %p46, %p47
      %p49 = scmp.ne.s32.totalorder %s35, %s36
      %p50 = scmp.eq.s32.totalorder %s28, 1
      %p51 = por %p49, %p50
      %p53 = scmp.ne.s32.totalorder %s36, %s52
      %p54 = scmp.eq.s32.totalorder %s28, 0
      %p55 = por %p53, %p54
      %s57 = sadd.s32 %s56, 1
      %p60 = scmp.eq.s32.totalorder %s22, 1
      %p61 = scmp.ne.s32.totalorder %s56, %s58
      %p62 = scmp.eq.s32.totalorder %s22, 0
      %p63 = por %p61, %p62
      %p64 = scmp.ne.s32.totalorder %s56, %s58
      %p65 = scmp.eq.s32.totalorder %s27, 1
      %p66 = por %p64, %p65
      %p67 = scmp.ne.s32.totalorder %s58, %s59
      %p68 = scmp.eq.s32.totalorder %s27, 0
      %p69 = por %p67, %p68
      %p70 = scmp.ne.s32.totalorder %s58, %s59
      %p71 = scmp.eq.s32.totalorder %s28, 1
      %p72 = por %p70, %p71
      %p74 = scmp.ne.s32.totalorder %s59, %s73
      %p75 = scmp.eq.s32.totalorder %s28, 0
      %p76 = por %p74, %p75
      %s78 = sadd.s32 %s77, 1
      %p81 = scmp.eq.s32.totalorder %s22, 1
      %p82 = scmp.ne.s32.totalorder %s77, %s79
      %p83 = scmp.eq.s32.totalorder %s22, 0
      %p84 = por %p82, %p83
      %p85 = scmp.ne.s32.totalorder %s77, %s79
      %p86 = scmp.eq.s32.totalorder %s27, 1
      %p87 = por %p85, %p86
      %p88 = scmp.ne.s32.totalorder %s79, %s80
      %p89 = scmp.eq.s32.totalorder %s27, 0
      %p90 = por %p88, %p89
      %p91 = scmp.ne.s32.totalorder %s79, %s80
      %p92 = scmp.eq.s32.totalorder %s28, 1
      %p93 = por %p91, %p92
      %p95 = scmp.ne.s32.totalorder %s80, %s94
      %p96 = scmp.eq.s32.totalorder %s28, 0
      %p97 = por %p95, %p96
      %s99 = sadd.s32 %s98, 1
      %p102 = scmp.eq.s32.totalorder %s22, 1
      %p103 = scmp.ne.s32.totalorder %s98, %s100
      %p104 = scmp.eq.s32.totalorder %s22, 0
      %p105 = por %p103, %p104
      %p106 = scmp.ne.s32.totalorder %s98, %s100
      %p107 = scmp.eq.s32.totalorder %s27, 1
      %p108 = por %p106, %p107
      %p109 = scmp.ne.s32.totalorder %s100, %s101
      %p110 = scmp.eq.s32.totalorder %s27, 0
      %p111 = por %p109, %p110
      %p112 = scmp.ne.s32.totalorder %s100, %s101
      %p113 = scmp.eq.s32.totalorder %s28, 1
      %p114 = por %p112, %p113
      %p116 = scmp.ne.s32.totalorder %s101, %s115
      %p117 = scmp.eq.s32.totalorder %s28, 0
      %p118 = por %p116, %p117
      %s120 = sadd.s32 %s119, 1
      %p123 = scmp.eq.s32.totalorder %s22, 1
      %p124 = scmp.ne.s32.totalorder %s119, %s121
      %p125 = scmp.eq.s32.totalorder %s22, 0
      %p126 = por %p124, %p125
      %p127 = scmp.ne.s32.totalorder %s119, %s121
      %p128 = scmp.eq.s32.totalorder %s27, 1
      %p129 = por %p127, %p128
      %p130 = scmp.ne.s32.totalorder %s121, %s122
      %p131 = scmp.eq.s32.totalorder %s27, 0
      %p132 = por %p130, %p131
      %p133 = scmp.ne.s32.totalorder %s121, %s122
      %p134 = scmp.eq.s32.totalorder %s28, 1
      %p135 = por %p133, %p134
      %p137 = scmp.ne.s32.totalorder %s122, %s136
      %p138 = scmp.eq.s32.totalorder %s28, 0
      %p139 = por %p137, %p138
      %s141 = sadd.s32 %s140, 1
      %p144 = scmp.eq.s32.totalorder %s22, 1
      %p145 = scmp.ne.s32.totalorder %s140, %s142
      %p146 = scmp.eq.s32.totalorder %s22, 0
      %p147 = por %p145, %p146
      %p148 = scmp.ne.s32.totalorder %s140, %s142
      %p149 = scmp.eq.s32.totalorder %s27, 1
      %p150 = por %p148, %p149
      %p151 = scmp.ne.s32.totalorder %s142, %s143
      %p152 = scmp.eq.s32.totalorder %s27, 0
      %p153 = por %p151, %p152
      %p154 = scmp.ne.s32.totalorder %s142, %s143
      %p155 = scmp.eq.s32.totalorder %s28, 1
      %p156 = por %p154, %p155
      %p158 = scmp.ne.s32.totalorder %s143, %s157
      %p159 = scmp.eq.s32.totalorder %s28, 0
      %p160 = por %p158, %p159
      %s162 = sadd.s32 %s161, 1
      %p165 = scmp.eq.s32.totalorder %s22, 1
      %p166 = scmp.ne.s32.totalorder %s161, %s163
      %p167 = scmp.eq.s32.totalorder %s22, 0
      %p168 = por %p166, %p167
      %p169 = scmp.ne.s32.totalorder %s161, %s163
      %p170 = scmp.eq.s32.totalorder %s27, 1
      %p171 = por %p169, %p170
      %p172 = scmp.ne.s32.totalorder %s163, %s164
      %p173 = scmp.eq.s32.totalorder %s27, 0
      %p174 = por %p172, %p173
      %p175 = scmp.ne.s32.totalorder %s163, %s164
      %p176 = scmp.eq.s32.totalorder %s28, 1
      %p177 = por %p175, %p176
      %p179 = scmp.ne.s32.totalorder %s164, %s178
      %p180 = scmp.eq.s32.totalorder %s28, 0
      %p181 = por %p179, %p180
      %s182 = ssub.s32 %s22, %s29
      %p183 = scmp.eq.s32.totalorder %s182, 0
      %s185 = sadd.s32 %s184, 1
      %s186 = scalar_select %p183, %s184, %s185
      %p189 = pneg %p183
      %p190 = scmp.eq.s32.totalorder %s22, 1
      %p191 = por %p189, %p190
      %p192 = scmp.ne.s32.totalorder %s184, %s187
      %p193 = scmp.eq.s32.totalorder %s22, 0
      %p194 = por %p192, %p193
      %p195 = scmp.ne.s32.totalorder %s184, %s187
      %p196 = scmp.eq.s32.totalorder %s27, 1
      %p197 = por %p195, %p196
      %p198 = scmp.ne.s32.totalorder %s187, %s188
      %p199 = scmp.eq.s32.totalorder %s27, 0
      %p200 = por %p198, %p199
      %p201 = scmp.ne.s32.totalorder %s187, %s188
      %p202 = scmp.eq.s32.totalorder %s28, 1
      %p203 = por %p201, %p202
      %p205 = scmp.ne.s32.totalorder %s188, %s204
      %p206 = scmp.eq.s32.totalorder %s28, 0
      %p207 = por %p205, %p206
      %p208 = scmp.le.s32.totalorder 1, %s22
      %p209 = scmp.lt.s32.totalorder %s22, 3
      %p210 = pnand %p208, %p209
      %p211 = pneg %p210
      // Predicated region
      $region9: #{tpu_custom_call.1} parent=5 // pred_check
        _
      $region10: #{tpu_custom_call.1} parent=5 // pred_check_branch
        %213 = sbr.rel (%p210) target = $region12
      $region11: #{tpu_custom_call.1} parent=5 // pred_region
        %s214 = ssub.s32 %s22, 1
        // Predicated region
        $region13: #{tpu_custom_call.1} parent=11 // pred_check
          %p215 = pneg %p69
        $region14: #{tpu_custom_call.1} parent=11 // pred_check_branch
          %217 = sbr.rel (%p215) target = $region16
        $region15: #{tpu_custom_call.1} parent=11 // pred_region
          %s219 = ssub.s32 16, 16
          %220 = vsyncadd [#allocation6], %s219
          %s222 = sshll.u32 [#allocation5], 4
          %s223 = int_to_ptr.vmem [resolvable:$true] %s222
          %225 = dma.hbm_to_vmem [thread:$0]  %s1, 16, %s223, [#allocation6]
        $region16: #{tpu_custom_call.1} parent=11 // pred_fallthru
          _
        // Predicated region
        $region17: #{tpu_custom_call.1} parent=11 // pred_check
          %p226 = pneg %p90
        $region18: #{tpu_custom_call.1} parent=11 // pred_check_branch
          %228 = sbr.rel (%p226) target = $region20
        $region19: #{tpu_custom_call.1} parent=11 // pred_region
          %s230 = ssub.s32 16, 16
          %231 = vsyncadd [#allocation6], %s230
          %s233 = sshll.u32 [#allocation7], 4
          %s234 = int_to_ptr.vmem [resolvable:$true] %s233
          %236 = dma.hbm_to_vmem [thread:$0]  %s2, 16, %s234, [#allocation6]
        $region20: #{tpu_custom_call.1} parent=11 // pred_fallthru
          _
        // Predicated region
        $region21: #{tpu_custom_call.1} parent=11 // pred_check
          %p237 = pneg %p111
        $region22: #{tpu_custom_call.1} parent=11 // pred_check_branch
          %239 = sbr.rel (%p237) target = $region24
        $region23: #{tpu_custom_call.1} parent=11 // pred_region
          %s241 = ssub.s32 2048, 2048
          %242 = vsyncadd [#allocation9], %s241
          %s243 = sshll.u32 [#allocation8], 4
          %s244 = int_to_ptr.vmem [resolvable:$true] %s243
          %249 = dma.hbm_to_vmem [thread:$0]  %s3, 2048, %s244, [#allocation9], 128, 128, 8
        $region24: #{tpu_custom_call.1} parent=11 // pred_fallthru
          _
        // Predicated region
        $region25: #{tpu_custom_call.1} parent=11 // pred_check
          %p250 = pneg %p132
        $region26: #{tpu_custom_call.1} parent=11 // pred_check_branch
          %252 = sbr.rel (%p250) target = $region28
        $region27: #{tpu_custom_call.1} parent=11 // pred_region
          %s254 = ssub.s32 16, 16
          %255 = vsyncadd [#allocation9], %s254
          %s257 = sshll.u32 [#allocation10], 4
          %s258 = int_to_ptr.vmem [resolvable:$true] %s257
          %260 = dma.hbm_to_vmem [thread:$0]  %s4, 16, %s258, [#allocation9]
        $region28: #{tpu_custom_call.1} parent=11 // pred_fallthru
          _
        // Predicated region
        $region29: #{tpu_custom_call.1} parent=11 // pred_check
          %p261 = pneg %p153
        $region30: #{tpu_custom_call.1} parent=11 // pred_check_branch
          %263 = sbr.rel (%p261) target = $region32
        $region31: #{tpu_custom_call.1} parent=11 // pred_region
          %s265 = ssub.s32 2048, 2048
          %266 = vsyncadd [#allocation12], %s265
          %s267 = sshll.u32 [#allocation11], 4
          %s268 = int_to_ptr.vmem [resolvable:$true] %s267
          %273 = dma.hbm_to_vmem [thread:$0]  %s5, 2048, %s268, [#allocation12], 128, 128, 8
        $region32: #{tpu_custom_call.1} parent=11 // pred_fallthru
          _
        // Predicated region
        $region33: #{tpu_custom_call.1} parent=11 // pred_check
          %p274 = pneg %p174
        $region34: #{tpu_custom_call.1} parent=11 // pred_check_branch
          %276 = sbr.rel (%p274) target = $region36
        $region35: #{tpu_custom_call.1} parent=11 // pred_region
          %s278 = ssub.s32 16, 16
          %279 = vsyncadd [#allocation12], %s278
          %s281 = sshll.u32 [#allocation13], 4
          %s282 = int_to_ptr.vmem [resolvable:$true] %s281
          %284 = dma.hbm_to_vmem [thread:$0]  %s6, 16, %s282, [#allocation12]
        $region36: #{tpu_custom_call.1} parent=11 // pred_fallthru
          _
      $region12: #{tpu_custom_call.1} parent=5 // pred_fallthru
        _
      %p285 = scmp.lt.s32.totalorder %s22, 2
      // Predicated region
      $region37: #{tpu_custom_call.1} parent=5 // pred_check
        %p286 = pneg %p285
      $region38: #{tpu_custom_call.1} parent=5 // pred_check_branch
        %288 = sbr.rel (%p286) target = $region40
      $region39: #{tpu_custom_call.1} parent=5 // pred_region
        // Predicated region
        $region41: #{tpu_custom_call.1} parent=39 // pred_check
          %p289 = pneg %p42
        $region42: #{tpu_custom_call.1} parent=39 // pred_check_branch
          %291 = sbr.rel (%p289) target = $region44
        $region43: #{tpu_custom_call.1} parent=39 // pred_region
          %s292 = sand.u32 %s32, 1
          %s293 = scalar_lea.sflag [#allocation3], %s292
          %s294 = sand.u32 %s32, 1
          %s295 = smul.addr %s294, 8
          %s296 = scalar_lea.vmem [#allocation2], %s295
          %s298 = ssub.s32 128, 128
          %299 = vsyncadd %s293, %s298
          %s300 = smul.addr %s22, 128
          %s301 = scalar_lea.hbm %s0, %s300
          %s303 = sshll.u32 %s296, 4
          %s304 = int_to_ptr.vmem [resolvable:$true] %s303
          %306 = dma.hbm_to_vmem [thread:$0]  %s301, 128, %s304, %s293
        $region44: #{tpu_custom_call.1} parent=39 // pred_fallthru
          _
      $region40: #{tpu_custom_call.1} parent=5 // pred_fallthru
        _
      %p307 = scmp.le.s32.totalorder 1, %s22
      %p308 = scmp.lt.s32.totalorder %s22, 3
      %p309 = pnand %p307, %p308
      %p310 = pneg %p309
      // Predicated region
      $region45: #{tpu_custom_call.1} parent=5 // pred_check
        _
      $region46: #{tpu_custom_call.1} parent=5 // pred_check_branch
        %312 = sbr.rel (%p309) target = $region48
      $region47: #{tpu_custom_call.1} parent=5 // pred_region
        %s313 = ssub.s32 %s22, 1
        %s314 = sand.u32 %s35, 1
        %s315 = scalar_lea.sflag [#allocation3], %s314
        %s316 = sand.u32 %s35, 1
        %s317 = smul.addr %s316, 8
        %s318 = scalar_lea.vmem [#allocation2], %s317
        // Predicated region
        $region49: #{tpu_custom_call.1} parent=47 // pred_check
          %p319 = pneg %p48
        $region50: #{tpu_custom_call.1} parent=47 // pred_check_branch
          %321 = sbr.rel (%p319) target = $region52
        $region51: #{tpu_custom_call.1} parent=47 // pred_region
          %322 = dma.done %s315, 128
        $region52: #{tpu_custom_call.1} parent=47 // pred_fallthru
          _
        // Predicated region
        $region53: #{tpu_custom_call.1} parent=47 // pred_check
          %p323 = pneg %p69
        $region54: #{tpu_custom_call.1} parent=47 // pred_check_branch
          %325 = sbr.rel (%p323) target = $region56
        $region55: #{tpu_custom_call.1} parent=47 // pred_region
          %326 = dma.done [#allocation6], 16
        $region56: #{tpu_custom_call.1} parent=47 // pred_fallthru
          _
        // Predicated region
        $region57: #{tpu_custom_call.1} parent=47 // pred_check
          %p327 = pneg %p90
        $region58: #{tpu_custom_call.1} parent=47 // pred_check_branch
          %329 = sbr.rel (%p327) target = $region60
        $region59: #{tpu_custom_call.1} parent=47 // pred_region
          %330 = dma.done [#allocation6], 16
        $region60: #{tpu_custom_call.1} parent=47 // pred_fallthru
          _
        // Predicated region
        $region61: #{tpu_custom_call.1} parent=47 // pred_check
          %p331 = pneg %p111
        $region62: #{tpu_custom_call.1} parent=47 // pred_check_branch
          %333 = sbr.rel (%p331) target = $region64
        $region63: #{tpu_custom_call.1} parent=47 // pred_region
          %334 = dma.done [#allocation9], 2048
        $region64: #{tpu_custom_call.1} parent=47 // pred_fallthru
          _
        // Predicated region
        $region65: #{tpu_custom_call.1} parent=47 // pred_check
          %p335 = pneg %p132
        $region66: #{tpu_custom_call.1} parent=47 // pred_check_branch
          %337 = sbr.rel (%p335) target = $region68
        $region67: #{tpu_custom_call.1} parent=47 // pred_region
          %338 = dma.done [#allocation9], 16
        $region68: #{tpu_custom_call.1} parent=47 // pred_fallthru
          _
        // Predicated region
        $region69: #{tpu_custom_call.1} parent=47 // pred_check
          %p339 = pneg %p153
        $region70: #{tpu_custom_call.1} parent=47 // pred_check_branch
          %341 = sbr.rel (%p339) target = $region72
        $region71: #{tpu_custom_call.1} parent=47 // pred_region
          %342 = dma.done [#allocation12], 2048
        $region72: #{tpu_custom_call.1} parent=47 // pred_fallthru
          _
        // Predicated region
        $region73: #{tpu_custom_call.1} parent=47 // pred_check
          %p343 = pneg %p174
        $region74: #{tpu_custom_call.1} parent=47 // pred_check_branch
          %345 = sbr.rel (%p343) target = $region76
        $region75: #{tpu_custom_call.1} parent=47 // pred_region
          %346 = dma.done [#allocation12], 16
        $region76: #{tpu_custom_call.1} parent=47 // pred_fallthru
          _
        %s347 = sand.u32 %s35, 1
        %s348 = scalar_lea.sflag [#allocation3], %s347
        %s349 = sand.u32 %s35, 1
        %s350 = smul.addr %s349, 8
        %s351 = scalar_lea.vmem [#allocation2], %s350
        %p352 = pneg %p48
        %p353 = pneg %p45
        %p354 = pneg %p69
        %p355 = pneg %p66
        %p356 = pneg %p90
        %p357 = pneg %p87
        %p358 = pneg %p111
        %p359 = pneg %p108
        %p360 = pneg %p132
        %p361 = pneg %p129
        %p362 = pneg %p153
        %p363 = pneg %p150
        %p364 = pneg %p174
        %p365 = pneg %p171
        %p366 = pneg %p200
        %p367 = pneg %p197
        %s368 = sand.u32 %s187, 1
        %s369 = scalar_lea.sflag [#allocation4], %s368
        %s370 = sand.u32 %s187, 1
        %s371 = smul.addr %s370, 8
        %s372 = scalar_lea.vmem [#allocation14], %s371
        %v373 = vld [vmem:[%s318] sm:$0xff]
        %374 = vadd.xlane.f32.xlu0 %v373
        %v375 = vpop.xlane.xlu0 %374
        %v376 = vmul.f32 %v373, %v373
        %377 = vadd.xlane.f32.xlu0 %v376
        %v378 = vpop.xlane.xlu0 %377
        %v379 = vmul.f32 %v375, 0.03125
        %v380 = vmul.f32 %v378, 0.03125
        %v381 = vmul.f32 %v379, %v379
        %v382 = vsub.f32 %v380, %v381
        %v383 = vmax.f32 %v382, 0.0
        %v384 = vadd.f32 %v383, 1e-05
        %v385 = vrsqrt.pop %v384
        %v386 = vsub.f32 %v373, %v379
        %v387 = vmul.f32 %v386, %v385
        %v388 = vld [vmem:[#allocation5] sm:$0x1]
        %v390 = vlaneseq
        %v391 = vshrl.u32 %v390, 7
        %v392 = vsub.s32 0, %v391
        %v393 = vrot.slane %v388, %v392
        %v395 = vmul.f32 %v387, %v393
        %v396 = vld [vmem:[#allocation7] sm:$0x1]
        %v398 = vlaneseq
        %v399 = vshrl.u32 %v398, 7
        %v400 = vsub.s32 0, %v399
        %v401 = vrot.slane %v396, %v400
        %v403 = vadd.f32 %v395, %v401
        %v404 = vld [vmem:[#allocation8] sm:$0xff]
        %v405 = vld [vmem:[#allocation8 + $0x8] sm:$0xff]
        %v406 = vld [vmem:[#allocation8 + $0x10] sm:$0xff]
        %v407 = vld [vmem:[#allocation8 + $0x18] sm:$0xff]
        %v408 = vld [vmem:[#allocation8 + $0x20] sm:$0xff]
        %v409 = vld [vmem:[#allocation8 + $0x28] sm:$0xff]
        %v410 = vld [vmem:[#allocation8 + $0x30] sm:$0xff]
        %v411 = vld [vmem:[#allocation8 + $0x38] sm:$0xff]
        %v412 = vld [vmem:[#allocation8 + $0x40] sm:$0xff]
        %v413 = vld [vmem:[#allocation8 + $0x48] sm:$0xff]
        %v414 = vld [vmem:[#allocation8 + $0x50] sm:$0xff]
        %v415 = vld [vmem:[#allocation8 + $0x58] sm:$0xff]
        %v416 = vld [vmem:[#allocation8 + $0x60] sm:$0xff]
        %v417 = vld [vmem:[#allocation8 + $0x68] sm:$0xff]
        %v418 = vld [vmem:[#allocation8 + $0x70] sm:$0xff]
        %v419 = vld [vmem:[#allocation8 + $0x78] sm:$0xff]
        %v420 = vld [vmem:[#allocation10] sm:$0x1]
        %v422 = vlaneseq
        %v423 = vshrl.u32 %v422, 7
        %v424 = vsub.s32 0, %v423
        %v425 = vrot.slane %v420, %v424
        %427 = vmatprep.subr.mxu0 0.0
        %428 = vmatpush1.xpose.msra.mxu0 %v404
        %429 = vmatprep.subr.mxu0 0.0
        %430 = vmatpush1.xpose.msra.mxu0 %v405
        %431 = vmatprep.subr.mxu0 0.0
        %432 = vmatpush1.xpose.msra.mxu0 %v406
        %433 = vmatprep.subr.mxu0 0.0
        %434 = vmatpush1.xpose.msra.mxu0 %v407
        %435 = vmatprep.subr.mxu0 0.0
        %436 = vmatpush1.xpose.msra.mxu0 %v408
        %437 = vmatprep.subr.mxu0 0.0
        %438 = vmatpush1.xpose.msra.mxu0 %v409
        %439 = vmatprep.subr.mxu0 0.0
        %440 = vmatpush1.xpose.msra.mxu0 %v410
        %441 = vmatprep.subr.mxu0 0.0
        %442 = vmatpush1.xpose.msra.mxu0 %v411
        %443 = vmatprep.subr.mxu0 0.0
        %444 = vmatpush1.xpose.msra.mxu0 %v412
        %445 = vmatprep.subr.mxu0 0.0
        %446 = vmatpush1.xpose.msra.mxu0 %v413
        %447 = vmatprep.subr.mxu0 0.0
        %448 = vmatpush1.xpose.msra.mxu0 %v414
        %449 = vmatprep.subr.mxu0 0.0
        %450 = vmatpush1.xpose.msra.mxu0 %v415
        %451 = vmatprep.subr.mxu0 0.0
        %452 = vmatpush1.xpose.msra.mxu0 %v416
        %453 = vmatprep.subr.mxu0 0.0
        %454 = vmatpush1.xpose.msra.mxu0 %v417
        %455 = vmatprep.subr.mxu0 0.0
        %456 = vmatpush1.xpose.msra.mxu0 %v418
        %457 = vmatprep.subr.mxu0 0.0
        %458 = vmatpush1.xpose.msra.mxu0 %v419
        %459 = vmatprep.subr.mxu0 0.0
        %460 = vmatpush1.xpose.msra.mxu0 0.0
        %461 = vmatprep.subr.mxu0 0.0
        %462 = vmatpush1.xpose.msra.mxu0 0.0
        %463 = vmatprep.subr.mxu0 0.0
        %464 = vmatpush1.xpose.msra.mxu0 0.0
        %465 = vmatprep.subr.mxu0 0.0
        %466 = vmatpush1.xpose.msra.mxu0 0.0
        %467 = vmatprep.subr.mxu0 0.0
        %468 = vmatpush1.xpose.msra.mxu0 0.0
        %469 = vmatprep.subr.mxu0 0.0
        %470 = vmatpush1.xpose.msra.mxu0 0.0
        %471 = vmatprep.subr.mxu0 0.0
        %472 = vmatpush1.xpose.msra.mxu0 0.0
        %473 = vmatprep.subr.mxu0 0.0
        %474 = vmatpush1.xpose.msra.mxu0 0.0
        %475 = vmatprep.subr.mxu0 0.0
        %476 = vmatpush1.xpose.msra.mxu0 0.0
        %477 = vmatprep.subr.mxu0 0.0
        %478 = vmatpush1.xpose.msra.mxu0 0.0
        %479 = vmatprep.subr.mxu0 0.0
        %480 = vmatpush1.xpose.msra.mxu0 0.0
        %481 = vmatprep.subr.mxu0 0.0
        %482 = vmatpush1.xpose.msra.mxu0 0.0
        %483 = vmatprep.subr.mxu0 0.0
        %484 = vmatpush1.xpose.msra.mxu0 0.0
        %485 = vmatprep.subr.mxu0 0.0
        %486 = vmatpush1.xpose.msra.mxu0 0.0
        %487 = vmatprep.subr.mxu0 0.0
        %488 = vmatpush1.xpose.msra.mxu0 0.0
        %489 = vmatprep.subr.mxu0 0.0
        %490 = vmatpush1.xpose.msra.mxu0 0.0
        %491 = vmatprep.mubr.f32.mxu0 0.0
        %492 = vmatmul.mubr.f32.gmra.mrb[0].mxu0 %v403
        %v493 = vpop.f32.mrb[0].mxu0
        %v494 = vadd.f32 %v425, %v493
        %v495 = vpop.f32.mrb[0].mxu0
        %496 = vdwg.mxu0
        %v497 = vmax.f32 %v494, 0.0
        %v498 = vld [vmem:[#allocation11] sm:$0xff]
        %v499 = vld [vmem:[#allocation11 + $0x8] sm:$0xff]
        %v500 = vld [vmem:[#allocation11 + $0x10] sm:$0xff]
        %v501 = vld [vmem:[#allocation11 + $0x18] sm:$0xff]
        %v502 = vld [vmem:[#allocation11 + $0x20] sm:$0xff]
        %v503 = vld [vmem:[#allocation11 + $0x28] sm:$0xff]
        %v504 = vld [vmem:[#allocation11 + $0x30] sm:$0xff]
        %v505 = vld [vmem:[#allocation11 + $0x38] sm:$0xff]
        %v506 = vld [vmem:[#allocation11 + $0x40] sm:$0xff]
        %v507 = vld [vmem:[#allocation11 + $0x48] sm:$0xff]
        %v508 = vld [vmem:[#allocation11 + $0x50] sm:$0xff]
        %v509 = vld [vmem:[#allocation11 + $0x58] sm:$0xff]
        %v510 = vld [vmem:[#allocation11 + $0x60] sm:$0xff]
        %v511 = vld [vmem:[#allocation11 + $0x68] sm:$0xff]
        %v512 = vld [vmem:[#allocation11 + $0x70] sm:$0xff]
        %v513 = vld [vmem:[#allocation11 + $0x78] sm:$0xff]
        %v514 = vld [vmem:[#allocation13] sm:$0x1]
        %v516 = vlaneseq
        %v517 = vshrl.u32 %v516, 7
        %v518 = vsub.s32 0, %v517
        %v519 = vrot.slane %v514, %v518
        %521 = vmatprep.subr.mxu0 0.0
        %522 = vmatpush1.xpose.msra.mxu0 %v498
        %523 = vmatprep.subr.mxu0 0.0
        %524 = vmatpush1.xpose.msra.mxu0 %v499
        %525 = vmatprep.subr.mxu0 0.0
        %526 = vmatpush1.xpose.msra.mxu0 %v500
        %527 = vmatprep.subr.mxu0 0.0
        %528 = vmatpush1.xpose.msra.mxu0 %v501
        %529 = vmatprep.subr.mxu0 0.0
        %530 = vmatpush1.xpose.msra.mxu0 %v502
        %531 = vmatprep.subr.mxu0 0.0
        %532 = vmatpush1.xpose.msra.mxu0 %v503
        %533 = vmatprep.subr.mxu0 0.0
        %534 = vmatpush1.xpose.msra.mxu0 %v504
        %535 = vmatprep.subr.mxu0 0.0
        %536 = vmatpush1.xpose.msra.mxu0 %v505
        %537 = vmatprep.subr.mxu0 0.0
        %538 = vmatpush1.xpose.msra.mxu0 %v506
        %539 = vmatprep.subr.mxu0 0.0
        %540 = vmatpush1.xpose.msra.mxu0 %v507
        %541 = vmatprep.subr.mxu0 0.0
        %542 = vmatpush1.xpose.msra.mxu0 %v508
        %543 = vmatprep.subr.mxu0 0.0
        %544 = vmatpush1.xpose.msra.mxu0 %v509
        %545 = vmatprep.subr.mxu0 0.0
        %546 = vmatpush1.xpose.msra.mxu0 %v510
        %547 = vmatprep.subr.mxu0 0.0
        %548 = vmatpush1.xpose.msra.mxu0 %v511
        %549 = vmatprep.subr.mxu0 0.0
        %550 = vmatpush1.xpose.msra.mxu0 %v512
        %551 = vmatprep.subr.mxu0 0.0
        %552 = vmatpush1.xpose.msra.mxu0 %v513
        %553 = vmatprep.subr.mxu0 0.0
        %554 = vmatpush1.xpose.msra.mxu0 0.0
        %555 = vmatprep.subr.mxu0 0.0
        %556 = vmatpush1.xpose.msra.mxu0 0.0
        %557 = vmatprep.subr.mxu0 0.0
        %558 = vmatpush1.xpose.msra.mxu0 0.0
        %559 = vmatprep.subr.mxu0 0.0
        %560 = vmatpush1.xpose.msra.mxu0 0.0
        %561 = vmatprep.subr.mxu0 0.0
        %562 = vmatpush1.xpose.msra.mxu0 0.0
        %563 = vmatprep.subr.mxu0 0.0
        %564 = vmatpush1.xpose.msra.mxu0 0.0
        %565 = vmatprep.subr.mxu0 0.0
        %566 = vmatpush1.xpose.msra.mxu0 0.0
        %567 = vmatprep.subr.mxu0 0.0
        %568 = vmatpush1.xpose.msra.mxu0 0.0
        %569 = vmatprep.subr.mxu0 0.0
        %570 = vmatpush1.xpose.msra.mxu0 0.0
        %571 = vmatprep.subr.mxu0 0.0
        %572 = vmatpush1.xpose.msra.mxu0 0.0
        %573 = vmatprep.subr.mxu0 0.0
        %574 = vmatpush1.xpose.msra.mxu0 0.0
        %575 = vmatprep.subr.mxu0 0.0
        %576 = vmatpush1.xpose.msra.mxu0 0.0
        %577 = vmatprep.subr.mxu0 0.0
        %578 = vmatpush1.xpose.msra.mxu0 0.0
        %579 = vmatprep.subr.mxu0 0.0
        %580 = vmatpush1.xpose.msra.mxu0 0.0
        %581 = vmatprep.subr.mxu0 0.0
        %582 = vmatpush1.xpose.msra.mxu0 0.0
        %583 = vmatprep.subr.mxu0 0.0
        %584 = vmatpush1.xpose.msra.mxu0 0.0
        %585 = vmatprep.mubr.f32.mxu0 0.0
        %586 = vmatmul.mubr.f32.gmra.mrb[0].mxu0 %v497
        %v587 = vpop.f32.mrb[0].mxu0
        %v588 = vadd.f32 %v519, %v587
        %v589 = vpop.f32.mrb[0].mxu0
        %590 = vdwg.mxu0
        %591 = vst [vmem:[%s372] sm:$0xff] %v588
        %s592 = sand.u32 %s187, 1
        %s593 = scalar_lea.sflag [#allocation4], %s592
        %s594 = sand.u32 %s187, 1
        %s595 = smul.addr %s594, 8
        %s596 = scalar_lea.vmem [#allocation14], %s595
        // Predicated region
        $region77: #{tpu_custom_call.1} parent=47 // pred_check
          %p597 = pneg %p197
        $region78: #{tpu_custom_call.1} parent=47 // pred_check_branch
          %599 = sbr.rel (%p597) target = $region80
        $region79: #{tpu_custom_call.1} parent=47 // pred_region
          %s601 = ssub.s32 128, 128
          %602 = vsyncadd %s593, %s601
          %s603 = smul.addr %s27, 128
          %s604 = scalar_lea.hbm %s7, %s603
          %s606 = sshll.u32 %s596, 4
          %s607 = int_to_ptr.vmem [resolvable:$true] %s606
          %609 = dma.vmem_to_hbm [thread:$0]  %s607, 128, %s604, %s593
        $region80: #{tpu_custom_call.1} parent=47 // pred_fallthru
          _
      $region48: #{tpu_custom_call.1} parent=5 // pred_fallthru
        _
      %p610 = scmp.le.s32.totalorder 2, %s22
      // Predicated region
      $region81: #{tpu_custom_call.1} parent=5 // pred_check
        %p611 = pneg %p610
      $region82: #{tpu_custom_call.1} parent=5 // pred_check_branch
        %613 = sbr.rel (%p611) target = $region84
      $region83: #{tpu_custom_call.1} parent=5 // pred_region
        %s614 = ssub.s32 %s22, 2
        // Predicated region
        $region85: #{tpu_custom_call.1} parent=83 // pred_check
          %p615 = pneg %p203
        $region86: #{tpu_custom_call.1} parent=83 // pred_check_branch
          %617 = sbr.rel (%p615) target = $region88
        $region87: #{tpu_custom_call.1} parent=83 // pred_region
          %s618 = sand.u32 %s188, 1
          %s619 = scalar_lea.sflag [#allocation4], %s618
          %s620 = sand.u32 %s188, 1
          %s621 = smul.addr %s620, 8
          %s622 = scalar_lea.vmem [#allocation14], %s621
          %623 = dma.done %s619, 128
        $region88: #{tpu_custom_call.1} parent=83 // pred_fallthru
          _
      $region84: #{tpu_custom_call.1} parent=5 // pred_fallthru
        _
    $region6: #{tpu_custom_call.1} parent=1 // loop_footer
      %s26 = sadd.s32 1, %s22
    $region7: #{tpu_custom_call.1} parent=1 // loop_footer_branch
      %21 = sbr.rel target = $region3
    $region8: #{tpu_custom_call.1} parent=1 // loop_exit
      _
    %624 = vsyncpa [#allocation3], 1
    %s625 = scalar_lea.sflag [#allocation3], 1
    %626 = vsyncpa %s625, 1
    %627 = vsyncpa [#allocation6], 1
    %628 = vsyncpa [#allocation9], 1
    %629 = vsyncpa [#allocation12], 1
    %630 = vsyncpa [#allocation4], 1
    %s631 = scalar_lea.sflag [#allocation4], 1
    %632 = vsyncpa %s631, 1

</llo_original>
